<compile_context>
chip_gen: v7x
topology: tpu7x:2x2x1
jax: 0.10.0
libtpu: 0.0.40
codegen_flags: <defaults>
</compile_context>

<pallas_src>
import functools

import numpy as np
import jax
import jax.numpy as jnp
from jax import lax
from jax.experimental import pallas as pl
from jax.experimental.pallas import tpu as pltpu


_VMEM_LIMIT = 32 * 1024 * 1024   # explicit scoped-VMEM budget (fits v5e/v6e/v7x)


def _round_up(n, m):
    return ((n + m - 1) // m) * m


def _sublane_align(dtype):
    # native sublane tile height: 8 rows for 4-byte dtypes, 16 for bf16
    return 32 // np.dtype(dtype).itemsize


def _flatten_weight(w_oik, c_in_pad):
    """(C_out, C_in, K) -> (C_out, K*c_in_pad), tap-major / channel-minor."""
    c_out, c_in, k = w_oik.shape
    w = jnp.transpose(w_oik, (0, 2, 1))                       # (C_out, K, C_in)
    if c_in_pad != c_in:
        w = jnp.pad(w, ((0, 0), (0, 0), (0, c_in_pad - c_in)))
    return w.reshape(c_out, k * c_in_pad)


# ----------------------------------------------------------------------------
# Generic Conv1d kernel (lane-dense, single big matmul, fused bias + LeakyReLU)
# ----------------------------------------------------------------------------
def _conv_kernel(x_ref, w_ref, b_ref, o_ref, *, K, stride, apply_lrelu,
                 neg_slope=0.2):
    # x_ref: (1, stride, C_in_pad, T_ph)   phase-split padded input
    # w_ref: (C_out, K*C_in_pad)           tap-major flattened weights
    # b_ref: (C_out, 1)                    float32 bias
    # o_ref: (1, C_out, T_out)             lane-dense output (T on lanes)
    t_out = o_ref.shape[-1]
    xph = x_ref[0]                                        # (stride, C_in_pad, T_ph)
    cols = []
    for k in range(K):                                    # static unroll over taps
        q, r = divmod(k, stride)
        cols.append(xph[r, :, q:q + t_out])               # (C_in_pad, T_out)
    xwin = cols[0] if K == 1 else jnp.concatenate(cols, axis=0)   # (K*C_in_pad, T_out)
    acc = jnp.dot(w_ref[...], xwin, preferred_element_type=jnp.float32)
    acc = acc + b_ref[...]
    if apply_lrelu:
        acc = jnp.where(acc >= 0, acc, neg_slope * acc)
    o_ref[0] = acc.astype(o_ref.dtype)


def conv1d_pallas(x_bct, w_oik, b_o, *, stride, padding, apply_lrelu,
                  compute_dtype):
    """PyTorch Conv1d semantics (NCW) + optional LeakyReLU(0.2)."""
    B, C_in, T = x_bct.shape
    C_out, _, K = w_oik.shape
    s = stride
    c_align = _sublane_align(compute_dtype)
    C_in_p = _round_up(C_in, c_align)

    T_out = (T + 2 * padding - K) // s + 1
    Q = -(-K // s)                       # taps per phase = ceil(K / stride)
    T_ph = T_out + Q - 1                 # per-phase window length the kernel needs
    L = max(T + 2 * padding, T_ph * s)   # total padded length

    x = x_bct.astype(compute_dtype)
    if C_in_p != C_in:
        x = jnp.pad(x, ((0, 0), (0, C_in_p - C_in), (0, 0)))
    x_pad = jnp.pad(x, ((0, 0), (0, 0), (padding, L - T - padding)))
    # phase split: phases[:, r, :, t] = x_pad[:, :, t*s + r]  (no K-fold im2col copy)
    phases = jnp.stack([x_pad[:, :, r::s][:, :, :T_ph] for r in range(s)], axis=1)

    w_flat = _flatten_weight(w_oik, C_in_p).astype(compute_dtype)   # (C_out, K*C_in_p)
    b_2d = b_o.reshape(C_out, 1).astype(jnp.float32)

    kernel = functools.partial(_conv_kernel, K=K, stride=s,
                               apply_lrelu=apply_lrelu)
    out = pl.pallas_call(
        kernel,
        out_shape=jax.ShapeDtypeStruct((B, C_out, T_out), compute_dtype),
        grid=(B,),
        in_specs=[
            pl.BlockSpec((1, s, C_in_p, T_ph), lambda b: (b, 0, 0, 0)),
            pl.BlockSpec((C_out, K * C_in_p), lambda b: (0, 0)),
            pl.BlockSpec((C_out, 1), lambda b: (0, 0)),
        ],
        out_specs=pl.BlockSpec((1, C_out, T_out), lambda b: (b, 0, 0)),
        compiler_params=pltpu.CompilerParams(
            dimension_semantics=("parallel",),
            vmem_limit_bytes=_VMEM_LIMIT),
    )(phases, w_flat, b_2d)
    return out


# ----------------------------------------------------------------------------
# Fused stride-1 tail: 3 x Conv1d(k=3,p=1)+LeakyReLU  +  judge Conv1d(k=3,p=1)
# Activation tile stays resident in VMEM between layers; features emitted from
# the same kernel (removes 4 HBM round-trips + 4 pallas_call launches).
# ----------------------------------------------------------------------------
def _tail_kernel(x_ref, w1_ref, b1_ref, w2_ref, b2_ref, w3_ref, b3_ref,
                 wj_ref, bj_ref, f1_ref, f2_ref, f3_ref, j_ref,
                 *, c_mid_pad, neg_slope=0.2):
    cd = x_ref.dtype
    T = f1_ref.shape[-1]

    def conv3(h, w_ref, b_ref, lrelu):
        C = h.shape[0]
        zc = jnp.zeros((C, 1), h.dtype)
        hp = jnp.concatenate([zc, h, zc], axis=1)                   # zero-pad T by 1
        xw = jnp.concatenate([hp[:, 0:T], hp[:, 1:T + 1], hp[:, 2:T + 2]], axis=0)
        y = jnp.dot(w_ref[...], xw, preferred_element_type=jnp.float32) + b_ref[...]
        if lrelu:
            y = jnp.where(y >= 0, y, neg_slope * y)
        return y                                                    # fp32 (C_out, T)

    def to_next(y):                      # cast to storage dtype & re-pad channels
        h = y.astype(cd)
        c = h.shape[0]
        if c_mid_pad != c:
            h = jnp.concatenate([h, jnp.zeros((c_mid_pad - c, T), cd)], axis=0)
        return h

    h = x_ref[0]                                           # (C_start_pad, T)
    y1 = conv3(h, w1_ref, b1_ref, True)
    f1_ref[0] = y1.astype(f1_ref.dtype)
    y2 = conv3(to_next(y1), w2_ref, b2_ref, True)
    f2_ref[0] = y2.astype(f2_ref.dtype)
    y3 = conv3(to_next(y2), w3_ref, b3_ref, True)
    f3_ref[0] = y3.astype(f3_ref.dtype)
    yj = conv3(to_next(y3), wj_ref, bj_ref, False)
    j_ref[0] = yj.astype(j_ref.dtype)


def tail_pallas(x_bct, mj_params, judge_params, *, compute_dtype):
    B, C0, T = x_bct.shape
    c_align = _sublane_align(compute_dtype)
    C0_p = _round_up(C0, c_align)
    (w1, b1), (w2, b2), (w3, b3) = mj_params
    wj, bj = judge_params
    C_mid = w1.shape[0]
    C_mid_p = _round_up(C_mid, c_align)

    x = x_bct.astype(compute_dtype)
    if C0_p != C0:
        x = jnp.pad(x, ((0, 0), (0, C0_p - C0), (0, 0)))

    wf = [
        _flatten_weight(w1, C0_p).astype(compute_dtype),
        _flatten_weight(w2, C_mid_p).astype(compute_dtype),
        _flatten_weight(w3, C_mid_p).astype(compute_dtype),
        _flatten_weight(wj, C_mid_p).astype(compute_dtype),
    ]
    bf = [b.reshape(-1, 1).astype(jnp.float32) for b in (b1, b2, b3, bj)]

    def wspec(a):
        return pl.BlockSpec(a.shape, lambda b: (0, 0))

    kernel = functools.partial(_tail_kernel, c_mid_pad=C_mid_p)
    f1, f2, f3, j = pl.pallas_call(
        kernel,
        out_shape=(
            jax.ShapeDtypeStruct((B, C_mid, T), compute_dtype),
            jax.ShapeDtypeStruct((B, C_mid, T), compute_dtype),
            jax.ShapeDtypeStruct((B, C_mid, T), compute_dtype),
            jax.ShapeDtypeStruct((B, 1, T), compute_dtype),
        ),
        grid=(B,),
        in_specs=[pl.BlockSpec((1, C0_p, T), lambda b: (b, 0, 0)),
                  wspec(wf[0]), wspec(bf[0]),
                  wspec(wf[1]), wspec(bf[1]),
                  wspec(wf[2]), wspec(bf[2]),
                  wspec(wf[3]), wspec(bf[3])],
        out_specs=(
            pl.BlockSpec((1, C_mid, T), lambda b: (b, 0, 0)),
            pl.BlockSpec((1, C_mid, T), lambda b: (b, 0, 0)),
            pl.BlockSpec((1, C_mid, T), lambda b: (b, 0, 0)),
            pl.BlockSpec((1, 1, T), lambda b: (b, 0, 0)),
        ),
        compiler_params=pltpu.CompilerParams(
            dimension_semantics=("parallel",),
            vmem_limit_bytes=_VMEM_LIMIT),
    )(x, wf[0], bf[0], wf[1], bf[1], wf[2], bf[2], wf[3], bf[3])
    return f1, f2, f3, j


# ----------------------------------------------------------------------------
# Parameter construction (deterministic, PyTorch-default-style uniform init)
# ----------------------------------------------------------------------------
def _init_conv(key, c_out, c_in, k):
    kw, kb = jax.random.split(key)
    bound = 1.0 / jnp.sqrt(c_in * k)
    w = jax.random.uniform(kw, (c_out, c_in, k), jnp.float32, -bound, bound)
    b = jax.random.uniform(kb, (c_out,), jnp.float32, -bound, bound)
    return w, b


def make_params(key, scale_factors, channels, conditioning_channels,
                fb_filters, fb_kernel):
    keys = jax.random.split(key, 16)
    ki = iter(keys)
    # synthetic filter bank: Conv1d(1 -> fb_filters, fb_kernel), no bias
    fb_w = jax.random.normal(next(ki), (fb_filters, 1, fb_kernel), jnp.float32) * 0.1

    main = [_init_conv(next(ki), channels[i + 1], channels[i], 7)
            for i in range(len(scale_factors))]

    start_channels = (channels[-1] + conditioning_channels
                      if conditioning_channels > 0 else channels[-1])
    mj = [
        _init_conv(next(ki), channels[-1], start_channels, 3),
        _init_conv(next(ki), channels[-1], channels[-1], 3),
        _init_conv(next(ki), channels[-1], channels[-1], 3),
    ]
    judge = _init_conv(next(ki), 1, channels[-1], 3)
    return {"fb_w": fb_w, "main": main, "mj": mj, "judge": judge}


# ----------------------------------------------------------------------------
# Forward pass (semantics of FilterBankChannelDiscriminator.forward)
# ----------------------------------------------------------------------------
def forward(params, x_ncw, feat_ncw, scale_factors, conditioning_channels,
            *, compute_dtype=jnp.bfloat16):
    T = x_ncw.shape[-1]
    fb_w = params["fb_w"]
    fb_k = fb_w.shape[-1]

    # filter_bank.convolve(x)[:, :, :T]
    h = conv1d_pallas(x_ncw, fb_w, jnp.zeros((fb_w.shape[0],), jnp.float32),
                      stride=1, padding=fb_k // 2, apply_lrelu=False,
                      compute_dtype=compute_dtype)[:, :, :T]

    features = []
    for (w, b), s in zip(params["main"], scale_factors):
        h = conv1d_pallas(h, w, b, stride=s, padding=7 // 2, apply_lrelu=True,
                          compute_dtype=compute_dtype)
        features.append(h)

    if conditioning_channels > 0:
        h = jnp.concatenate([h, feat_ncw.astype(compute_dtype)], axis=1)

    f1, f2, f3, j = tail_pallas(h, params["mj"], params["judge"],
                                compute_dtype=compute_dtype)
    features += [f1, f2, f3]
    return features, f3, j           # x after mj == last feature map


# ----------------------------------------------------------------------------
# Pure-JAX reference (same cast points as the Pallas path)
# ----------------------------------------------------------------------------
def _ref_conv1d(x, w, b, stride, padding, lrelu, cd):
    y = lax.conv_general_dilated(
        x.astype(cd), w.astype(cd), (stride,), [(padding, padding)],
        dimension_numbers=("NCH", "OIH", "NCH"),
        preferred_element_type=jnp.float32,
        precision=lax.Precision.HIGHEST)
    y = y + b[None, :, None].astype(jnp.float32)
    if lrelu:
        y = jnp.where(y >= 0, y, 0.2 * y)
    return y.astype(cd)


def reference_forward(params, x, feat, scale_factors, conditioning_channels, cd):
    T = x.shape[-1]
    fb_w = params["fb_w"]
    h = _ref_conv1d(x, fb_w, jnp.zeros((fb_w.shape[0],), jnp.float32),
                    1, fb_w.shape[-1] // 2, False, cd)[:, :, :T]
    features = []
    for (w, b), s in zip(params["main"], scale_factors):
        h = _ref_conv1d(h, w, b, s, 3, True, cd)
        features.append(h)
    if conditioning_channels > 0:
        h = jnp.concatenate([h, feat.astype(cd)], axis=1)
    for (w, b) in params["mj"]:
        h = _ref_conv1d(h, w, b, 1, 1, True, cd)
        features.append(h)
    wj, bj = params["judge"]
    j = _ref_conv1d(h, wj, bj, 1, 1, False, cd)
    return features, h, j


def _run_check(params, x, feat, scale_factors, cond, compute_dtype, tol):
    feats, x_out, j_out = forward(params, x, feat, scale_factors, cond,
                                  compute_dtype=compute_dtype)
    jax.block_until_ready(j_out)
    r_feats, r_x, r_j = reference_forward(params, x, feat, scale_factors, cond,
                                          compute_dtype)
    assert len(feats) == len(r_feats)
    for a, r in zip(feats, r_feats):
        assert a.shape == r.shape, (a.shape, r.shape)
        err = float(jnp.max(jnp.abs(a.astype(jnp.float32) - r.astype(jnp.float32))))
        assert err < tol, err
    assert x_out.shape == r_x.shape
    assert float(jnp.max(jnp.abs(x_out.astype(jnp.float32) - r_x.astype(jnp.float32)))) < tol
    assert j_out.shape == r_j.shape
    assert float(jnp.max(jnp.abs(j_out.astype(jnp.float32) - r_j.astype(jnp.float32)))) < tol


# ----------------------------------------------------------------------------
if __name__ == "__main__":
    key = jax.random.PRNGKey(0)
    k_params, k_x, k_feat = jax.random.split(key, 3)

    B, T = 2, 32
    scale_factors = [2, 2]
    channels = [8, 16, 32]          # channels[0] == number of filter-bank filters
    conditioning_channels = 4
    fb_kernel = 7
    T_final = T // (scale_factors[0] * scale_factors[1])   # 8

    params = make_params(k_params, scale_factors, channels,
                         conditioning_channels, channels[0], fb_kernel)

    x = jax.random.normal(k_x, (B, 1, T), jnp.float32)                     # NCW
    feat = jax.random.normal(k_feat, (B, conditioning_channels, T_final))  # NCW

    # float32 path: tight numerical check against the pure-JAX reference
    _run_check(params, x, feat, scale_factors, conditioning_channels,
               jnp.float32, 1e-3)
    # bfloat16 path (halved HBM traffic, native MXU dtype): looser tolerance
    _run_check(params, x, feat, scale_factors, conditioning_channels,
               jnp.bfloat16, 5e-2)

    print("KERNEL_OK")
</pallas_src>

<mosaic_0001>
module attributes {stable_mosaic.version = 11 : i64} {
  func.func @_conv_kernel(%arg0: i32, %arg1: memref<1x1x8x38xf32, #tpu.memory_space<vmem>>, %arg2: memref<8x56xf32, #tpu.memory_space<vmem>>, %arg3: memref<8x1xf32, #tpu.memory_space<vmem>>, %arg4: memref<1x8x32xf32, #tpu.memory_space<vmem>>) attributes {dimension_semantics = [#tpu.dimension_semantics<parallel>], iteration_bounds = array<i64: 2>, scalar_prefetch = 0 : i64, scratch_operands = 0 : i64, tpu.core_type = #tpu.core_type<tc>, window_params = [{transform_indices = @transform_0, window_bounds = array<i64: 1, 1, 8, 38>}, {pipeline_mode = #tpu.pipeline_mode<synchronous>, transform_indices = @transform_1, window_bounds = array<i64: 8, 56>}, {pipeline_mode = #tpu.pipeline_mode<synchronous>, transform_indices = @transform_2, window_bounds = array<i64: 8, 1>}, {transform_indices = @transform_3, window_bounds = array<i64: 1, 8, 32>}]} {
    %c0 = arith.constant 0 : index
    %c0_0 = arith.constant 0 : index
    %c0_1 = arith.constant 0 : index
    %c0_2 = arith.constant 0 : index
    %0 = vector.load %arg1[%c0, %c0_0, %c0_1, %c0_2] : memref<1x1x8x38xf32, #tpu.memory_space<vmem>>, vector<1x1x8x38xf32>
    %1 = vector.shape_cast %0 : vector<1x1x8x38xf32> to vector<1x8x38xf32>
    %2 = vector.extract_strided_slice %1 {offsets = [0, 0, 0], sizes = [1, 8, 32], strides = [1, 1, 1]} : vector<1x8x38xf32> to vector<1x8x32xf32>
    %3 = vector.shape_cast %2 : vector<1x8x32xf32> to vector<8x32xf32>
    %4 = vector.extract_strided_slice %1 {offsets = [0, 0, 1], sizes = [1, 8, 32], strides = [1, 1, 1]} : vector<1x8x38xf32> to vector<1x8x32xf32>
    %5 = vector.shape_cast %4 : vector<1x8x32xf32> to vector<8x32xf32>
    %6 = vector.extract_strided_slice %1 {offsets = [0, 0, 2], sizes = [1, 8, 32], strides = [1, 1, 1]} : vector<1x8x38xf32> to vector<1x8x32xf32>
    %7 = vector.shape_cast %6 : vector<1x8x32xf32> to vector<8x32xf32>
    %8 = vector.extract_strided_slice %1 {offsets = [0, 0, 3], sizes = [1, 8, 32], strides = [1, 1, 1]} : vector<1x8x38xf32> to vector<1x8x32xf32>
    %9 = vector.shape_cast %8 : vector<1x8x32xf32> to vector<8x32xf32>
    %10 = vector.extract_strided_slice %1 {offsets = [0, 0, 4], sizes = [1, 8, 32], strides = [1, 1, 1]} : vector<1x8x38xf32> to vector<1x8x32xf32>
    %11 = vector.shape_cast %10 : vector<1x8x32xf32> to vector<8x32xf32>
    %12 = vector.extract_strided_slice %1 {offsets = [0, 0, 5], sizes = [1, 8, 32], strides = [1, 1, 1]} : vector<1x8x38xf32> to vector<1x8x32xf32>
    %13 = vector.shape_cast %12 : vector<1x8x32xf32> to vector<8x32xf32>
    %14 = vector.extract_strided_slice %1 {offsets = [0, 0, 6], sizes = [1, 8, 32], strides = [1, 1, 1]} : vector<1x8x38xf32> to vector<1x8x32xf32>
    %15 = vector.shape_cast %14 : vector<1x8x32xf32> to vector<8x32xf32>
    %16 = tpu.concatenate %3, %5, %7, %9, %11, %13, %15 in 0 : vector<8x32xf32>, vector<8x32xf32>, vector<8x32xf32>, vector<8x32xf32>, vector<8x32xf32>, vector<8x32xf32>, vector<8x32xf32> -> vector<56x32xf32>
    %c0_3 = arith.constant 0 : index
    %c0_4 = arith.constant 0 : index
    %17 = vector.load %arg2[%c0_3, %c0_4] : memref<8x56xf32, #tpu.memory_space<vmem>>, vector<8x56xf32>
    %cst = arith.constant dense<0.000000e+00> : vector<8x32xf32>
    %18 = tpu.matmul %17, %16, %cst {dimension_numbers = #tpu.dot_dimension_numbers<[1], [0], [0], [1], [0, 0, 1, 1], [], []>} : vector<8x56xf32>, vector<56x32xf32>, vector<8x32xf32> -> vector<8x32xf32>
    %c0_5 = arith.constant 0 : index
    %c0_6 = arith.constant 0 : index
    %19 = vector.load %arg3[%c0_5, %c0_6] : memref<8x1xf32, #tpu.memory_space<vmem>>, vector<8x1xf32>
    %20 = vector.broadcast %19 : vector<8x1xf32> to vector<8x32xf32>
    %21 = arith.addf %18, %20 : vector<8x32xf32>
    %c0_7 = arith.constant 0 : index
    %c0_8 = arith.constant 0 : index
    %c0_9 = arith.constant 0 : index
    %22 = vector.load %arg4[%c0_7, %c0_8, %c0_9] : memref<1x8x32xf32, #tpu.memory_space<vmem>>, vector<1x8x32xf32>
    %23 = vector.shape_cast %22 : vector<1x8x32xf32> to vector<8x32xf32>
    %24 = vector.shape_cast %21 : vector<8x32xf32> to vector<1x8x32xf32>
    tpu.vector_store %arg4[%c0_7, %c0_8, %c0_9], %24 {strides = array<i32>} : memref<1x8x32xf32, #tpu.memory_space<vmem>>, vector<1x8x32xf32>,
    return
  }
  func.func @transform_0(%arg0: i32) -> (i32, i32, i32, i32) {
    %c0_i32 = arith.constant 0 : i32
    %c0_i32_0 = arith.constant 0 : i32
    %c0_i32_1 = arith.constant 0 : i32
    %c0_i32_2 = arith.constant 0 : i32
    return %arg0, %c0_i32, %c0_i32_0, %c0_i32_1 : i32, i32, i32, i32
  }
  func.func @transform_1(%arg0: i32) -> (i32, i32) {
    %c0_i32 = arith.constant 0 : i32
    %c0_i32_0 = arith.constant 0 : i32
    %c0_i32_1 = arith.constant 0 : i32
    return %c0_i32, %c0_i32_0 : i32, i32
  }
  func.func @transform_2(%arg0: i32) -> (i32, i32) {
    %c0_i32 = arith.constant 0 : i32
    %c0_i32_0 = arith.constant 0 : i32
    %c0_i32_1 = arith.constant 0 : i32
    return %c0_i32, %c0_i32_0 : i32, i32
  }
  func.func @transform_3(%arg0: i32) -> (i32, i32, i32) {
    %c0_i32 = arith.constant 0 : i32
    %c0_i32_0 = arith.constant 0 : i32
    %c0_i32_1 = arith.constant 0 : i32
    return %arg0, %c0_i32, %c0_i32_0 : i32, i32, i32
  }
}

</mosaic_0001>

<llo_original>
// kernel: tpu_custom_call.1
$region0: #{tpu_custom_call.1}
  #allocation0 [shape = 'u32[]', space=smem, size = 0x4, offset = 0x4, fixed_abs, tag = 'smem constant byte address 0x4 - core index']
  #allocation1 [shape = 'u32[144,128]{1,0:T(1,128)}', space=vmem, size = 0x12000, scoped, tag = 'internal scratch']
  %s0 = inlined_call_operand.hbm [shape: f32[2,1,8,38], index: 0, kind: input, shape index: {}]
  %s1 = inlined_call_operand.vmem [shape: f32[8,56], index: 1, kind: input, shape index: {}]
  %s2 = inlined_call_operand.vmem [shape: f32[8,1], index: 2, kind: input, shape index: {}]
  %s3 = inlined_call_operand.hbm [shape: f32[2,8,32], index: 3, kind: output, shape index: {}]
  %s4 = sld [smem:[#allocation0]]
  $region49: #{tpu_custom_call.1} parent=0
    _
  %s6 = ssub.s32 1, %s4
  %s7 = scalar_select 0, %s6, %s4
  $region1: #{tpu_custom_call.1} parent=0
    #allocation2 [shape = 'u8[8192]{0}', space=vmem, size = 0x2000, scoped, tag = 'input window, operand 0']
    #allocation3 [shape = 's32[2]{0}', space=sflag, size = 0x8, scoped, tag = 'scoped memory for tpu_custom_call.1']
    #allocation4 [shape = 's32[2]{0}', space=sflag, size = 0x8, scoped, tag = 'scoped memory for tpu_custom_call.1']
    #allocation5 [shape = 'u8[8192]{0}', space=vmem, size = 0x2000, scoped, tag = 'output window, operand 0']
    %8 = vsyncpa [#allocation3], 0
    %s9 = scalar_lea.sflag [#allocation3], 1
    %10 = vsyncpa %s9, 0
    %11 = vsyncpa [#allocation4], 0
    %s12 = scalar_lea.sflag [#allocation4], 1
    %13 = vsyncpa %s12, 0
    loop: start=0, step=1, limit=4
    $region2: #{tpu_custom_call.1} parent=1 // loop_pre_header
      _
    $region3: #{tpu_custom_call.1} parent=1 // loop_header
      %s15 = sphi 0, %s19
      %p16 = scmp.ge.s32.totalorder %s15, 4
      %s25 = sphi 0, %s27
      %s28 = sphi 0, %s25
      %s29 = sphi 0, %s28
      %s45 = sphi 0, %s29
      %s49 = sphi 0, %s49
      %s51 = sphi 0, %s49
      %s52 = sphi 0, %s51
      %s66 = sphi 0, %s52
      %s70 = sphi 0, %s70
      %s72 = sphi 0, %s70
      %s73 = sphi 0, %s72
      %s87 = sphi 0, %s73
      %s93 = sphi 0, %s95
      %s96 = sphi 0, %s93
      %s97 = sphi 0, %s96
      %s113 = sphi 0, %s97
    $region4: #{tpu_custom_call.1} parent=1 // loop_header_branch
      %18 = sbr.rel (%p16) target = $region8
    $region5: #{tpu_custom_call.1} parent=1 // loop_body
      %s20 = ssub.s32 %s15, 1
      %s21 = ssub.s32 %s15, 2
      %s22 = sadd.s32 %s15, 1
      %s23 = ssub.s32 %s15, %s22
      %p24 = scmp.eq.s32.totalorder %s23, 0
      %s26 = sadd.s32 %s25, 1
      %s27 = scalar_select %p24, %s25, %s26
      %p30 = pneg %p24
      %p31 = scmp.eq.s32.totalorder %s15, 1
      %p32 = por %p30, %p31
      %p33 = scmp.ne.s32.totalorder %s25, %s28
      %p34 = scmp.eq.s32.totalorder %s15, 0
      %p35 = por %p33, %p34
      %p36 = scmp.ne.s32.totalorder %s25, %s28
      %p37 = scmp.eq.s32.totalorder %s20, 1
      %p38 = por %p36, %p37
      %p39 = scmp.ne.s32.totalorder %s28, %s29
      %p40 = scmp.eq.s32.totalorder %s20, 0
      %p41 = por %p39, %p40
      %p42 = scmp.ne.s32.totalorder %s28, %s29
      %p43 = scmp.eq.s32.totalorder %s21, 1
      %p44 = por %p42, %p43
      %p46 = scmp.ne.s32.totalorder %s29, %s45
      %p47 = scmp.eq.s32.totalorder %s21, 0
      %p48 = por %p46, %p47
      %s50 = sadd.s32 %s49, 1
      %p53 = scmp.eq.s32.totalorder %s15, 1
      %p54 = scmp.ne.s32.totalorder %s49, %s51
      %p55 = scmp.eq.s32.totalorder %s15, 0
      %p56 = por %p54, %p55
      %p57 = scmp.ne.s32.totalorder %s49, %s51
      %p58 = scmp.eq.s32.totalorder %s20, 1
      %p59 = por %p57, %p58
      %p60 = scmp.ne.s32.totalorder %s51, %s52
      %p61 = scmp.eq.s32.totalorder %s20, 0
      %p62 = por %p60, %p61
      %p63 = scmp.ne.s32.totalorder %s51, %s52
      %p64 = scmp.eq.s32.totalorder %s21, 1
      %p65 = por %p63, %p64
      %p67 = scmp.ne.s32.totalorder %s52, %s66
      %p68 = scmp.eq.s32.totalorder %s21, 0
      %p69 = por %p67, %p68
      %s71 = sadd.s32 %s70, 1
      %p74 = scmp.eq.s32.totalorder %s15, 1
      %p75 = scmp.ne.s32.totalorder %s70, %s72
      %p76 = scmp.eq.s32.totalorder %s15, 0
      %p77 = por %p75, %p76
      %p78 = scmp.ne.s32.totalorder %s70, %s72
      %p79 = scmp.eq.s32.totalorder %s20, 1
      %p80 = por %p78, %p79
      %p81 = scmp.ne.s32.totalorder %s72, %s73
      %p82 = scmp.eq.s32.totalorder %s20, 0
      %p83 = por %p81, %p82
      %p84 = scmp.ne.s32.totalorder %s72, %s73
      %p85 = scmp.eq.s32.totalorder %s21, 1
      %p86 = por %p84, %p85
      %p88 = scmp.ne.s32.totalorder %s73, %s87
      %p89 = scmp.eq.s32.totalorder %s21, 0
      %p90 = por %p88, %p89
      %s91 = ssub.s32 %s15, %s22
      %p92 = scmp.eq.s32.totalorder %s91, 0
      %s94 = sadd.s32 %s93, 1
      %s95 = scalar_select %p92, %s93, %s94
      %p98 = pneg %p92
      %p99 = scmp.eq.s32.totalorder %s15, 1
      %p100 = por %p98, %p99
      %p101 = scmp.ne.s32.totalorder %s93, %s96
      %p102 = scmp.eq.s32.totalorder %s15, 0
      %p103 = por %p101, %p102
      %p104 = scmp.ne.s32.totalorder %s93, %s96
      %p105 = scmp.eq.s32.totalorder %s20, 1
      %p106 = por %p104, %p105
      %p107 = scmp.ne.s32.totalorder %s96, %s97
      %p108 = scmp.eq.s32.totalorder %s20, 0
      %p109 = por %p107, %p108
      %p110 = scmp.ne.s32.totalorder %s96, %s97
      %p111 = scmp.eq.s32.totalorder %s21, 1
      %p112 = por %p110, %p111
      %p114 = scmp.ne.s32.totalorder %s97, %s113
      %p115 = scmp.eq.s32.totalorder %s21, 0
      %p116 = por %p114, %p115
      %p117 = scmp.le.s32.totalorder 1, %s15
      %p118 = scmp.lt.s32.totalorder %s15, 3
      %p119 = pnand %p117, %p118
      %p120 = pneg %p119
      // Predicated region
      $region9: #{tpu_custom_call.1} parent=5 // pred_check
        _
      $region10: #{tpu_custom_call.1} parent=5 // pred_check_branch
        %122 = sbr.rel (%p119) target = $region12
      $region11: #{tpu_custom_call.1} parent=5 // pred_region
        %s123 = ssub.s32 %s15, 1
        // Predicated region
        $region13: #{tpu_custom_call.1} parent=11 // pred_check
          %p124 = pneg %p62
        $region14: #{tpu_custom_call.1} parent=11 // pred_check_branch
          %126 = sbr.rel (%p124) target = $region16
        $region15: #{tpu_custom_call.1} parent=11 // pred_region
          _
        $region16: #{tpu_custom_call.1} parent=11 // pred_fallthru
          _
        // Predicated region
        $region17: #{tpu_custom_call.1} parent=11 // pred_check
          %p127 = pneg %p83
        $region18: #{tpu_custom_call.1} parent=11 // pred_check_branch
          %129 = sbr.rel (%p127) target = $region20
        $region19: #{tpu_custom_call.1} parent=11 // pred_region
          _
        $region20: #{tpu_custom_call.1} parent=11 // pred_fallthru
          _
      $region12: #{tpu_custom_call.1} parent=5 // pred_fallthru
        _
      %p130 = scmp.lt.s32.totalorder %s15, 2
      // Predicated region
      $region21: #{tpu_custom_call.1} parent=5 // pred_check
        %p131 = pneg %p130
      $region22: #{tpu_custom_call.1} parent=5 // pred_check_branch
        %133 = sbr.rel (%p131) target = $region24
      $region23: #{tpu_custom_call.1} parent=5 // pred_region
        // Predicated region
        $region25: #{tpu_custom_call.1} parent=23 // pred_check
          %p134 = pneg %p35
        $region26: #{tpu_custom_call.1} parent=23 // pred_check_branch
          %136 = sbr.rel (%p134) target = $region28
        $region27: #{tpu_custom_call.1} parent=23 // pred_region
          %s137 = sand.u32 %s25, 1
          %s138 = scalar_lea.sflag [#allocation3], %s137
          %s139 = sand.u32 %s25, 1
          %s140 = smul.addr %s139, 8
          %s141 = scalar_lea.vmem [#allocation2], %s140
          %s143 = ssub.s32 128, 128
          %144 = vsyncadd %s138, %s143
          %s145 = smul.addr %s15, 128
          %s146 = scalar_lea.hbm %s0, %s145
          %s148 = sshll.u32 %s141, 4
          %s149 = int_to_ptr.vmem [resolvable:$true] %s148
          %151 = dma.hbm_to_vmem [thread:$0]  %s146, 128, %s149, %s138
        $region28: #{tpu_custom_call.1} parent=23 // pred_fallthru
          _
      $region24: #{tpu_custom_call.1} parent=5 // pred_fallthru
        _
      %p152 = scmp.le.s32.totalorder 1, %s15
      %p153 = scmp.lt.s32.totalorder %s15, 3
      %p154 = pnand %p152, %p153
      %p155 = pneg %p154
      // Predicated region
      $region29: #{tpu_custom_call.1} parent=5 // pred_check
        _
      $region30: #{tpu_custom_call.1} parent=5 // pred_check_branch
        %157 = sbr.rel (%p154) target = $region32
      $region31: #{tpu_custom_call.1} parent=5 // pred_region
        %s158 = ssub.s32 %s15, 1
        %s159 = sand.u32 %s28, 1
        %s160 = scalar_lea.sflag [#allocation3], %s159
        %s161 = sand.u32 %s28, 1
        %s162 = smul.addr %s161, 8
        %s163 = scalar_lea.vmem [#allocation2], %s162
        // Predicated region
        $region33: #{tpu_custom_call.1} parent=31 // pred_check
          %p164 = pneg %p41
        $region34: #{tpu_custom_call.1} parent=31 // pred_check_branch
          %166 = sbr.rel (%p164) target = $region36
        $region35: #{tpu_custom_call.1} parent=31 // pred_region
          %167 = dma.done %s160, 128
        $region36: #{tpu_custom_call.1} parent=31 // pred_fallthru
          _
        %s168 = sand.u32 %s28, 1
        %s169 = scalar_lea.sflag [#allocation3], %s168
        %s170 = sand.u32 %s28, 1
        %s171 = smul.addr %s170, 8
        %s172 = scalar_lea.vmem [#allocation2], %s171
        %p173 = pneg %p41
        %p174 = pneg %p38
        %p175 = pneg %p62
        %p176 = pneg %p59
        %p177 = pneg %p83
        %p178 = pneg %p80
        %p179 = pneg %p109
        %p180 = pneg %p106
        %s181 = sand.u32 %s96, 1
        %s182 = scalar_lea.sflag [#allocation4], %s181
        %s183 = sand.u32 %s96, 1
        %s184 = smul.addr %s183, 8
        %s185 = scalar_lea.vmem [#allocation5], %s184
        %v186 = vld [vmem:[%s163] sm:$0xff]
        %188 = vrot.lane.b32.xlu0 %v186, 127
        %v189 = vpop.permute.xlu0 %188
        %191 = vrot.lane.b32.xlu0 %v186, 126
        %v192 = vpop.permute.xlu0 %191
        %194 = vrot.lane.b32.xlu0 %v186, 125
        %v195 = vpop.permute.xlu0 %194
        %197 = vrot.lane.b32.xlu0 %v186, 124
        %v198 = vpop.permute.xlu0 %197
        %200 = vrot.lane.b32.xlu0 %v186, 123
        %v201 = vpop.permute.xlu0 %200
        %203 = vrot.lane.b32.xlu0 %v186, 122
        %v204 = vpop.permute.xlu0 %203
        %v206 = vld [vmem:[%s1] sm:$0xff]
        %v207 = vld [vmem:[%s2] sm:$0xff]
        %209 = vset.pattern.permute.xlu0 0
        %210 = vperm.xlu0 %209, %v207
        %v211 = vpop.permute.xlu0 %210
        %vm213 = vcmask 457728
        %v215 = vsel %vm213, %v206, 0
        %217 = vmatprep.subr.mxu0 0.0
        %218 = vmatpush1.msra.mxu0 %v186
        %219 = vmatprep.subr.mxu0 0.0
        %220 = vmatpush1.msra.mxu0 %v189
        %221 = vmatprep.subr.mxu0 0.0
        %222 = vmatpush1.msra.mxu0 %v192
        %223 = vmatprep.subr.mxu0 0.0
        %224 = vmatpush1.msra.mxu0 %v195
        %225 = vmatprep.subr.mxu0 0.0
        %226 = vmatpush1.msra.mxu0 %v198
        %227 = vmatprep.subr.mxu0 0.0
        %228 = vmatpush1.msra.mxu0 %v201
        %229 = vmatprep.subr.mxu0 0.0
        %230 = vmatpush1.msra.mxu0 %v204
        %231 = vmatprep.subr.mxu0 0.0
        %232 = vmatpush1.msra.mxu0 0.0
        %233 = vmatprep.subr.mxu0 0.0
        %234 = vmatpush1.msra.mxu0 0.0
        %235 = vmatprep.subr.mxu0 0.0
        %236 = vmatpush1.msra.mxu0 0.0
        %237 = vmatprep.subr.mxu0 0.0
        %238 = vmatpush1.msra.mxu0 0.0
        %239 = vmatprep.subr.mxu0 0.0
        %240 = vmatpush1.msra.mxu0 0.0
        %241 = vmatprep.subr.mxu0 0.0
        %242 = vmatpush1.msra.mxu0 0.0
        %243 = vmatprep.subr.mxu0 0.0
        %244 = vmatpush1.msra.mxu0 0.0
        %245 = vmatprep.subr.mxu0 0.0
        %246 = vmatpush1.msra.mxu0 0.0
        %247 = vmatprep.subr.mxu0 0.0
        %248 = vmatpush1.msra.mxu0 0.0
        %249 = vmatprep.subr.mxu0 0.0
        %250 = vmatpush1.msra.mxu0 0.0
        %251 = vmatprep.subr.mxu0 0.0
        %252 = vmatpush1.msra.mxu0 0.0
        %253 = vmatprep.subr.mxu0 0.0
        %254 = vmatpush1.msra.mxu0 0.0
        %255 = vmatprep.subr.mxu0 0.0
        %256 = vmatpush1.msra.mxu0 0.0
        %257 = vmatprep.subr.mxu0 0.0
        %258 = vmatpush1.msra.mxu0 0.0
        %259 = vmatprep.subr.mxu0 0.0
        %260 = vmatpush1.msra.mxu0 0.0
        %261 = vmatprep.subr.mxu0 0.0
        %262 = vmatpush1.msra.mxu0 0.0
        %263 = vmatprep.subr.mxu0 0.0
        %264 = vmatpush1.msra.mxu0 0.0
        %265 = vmatprep.subr.mxu0 0.0
        %266 = vmatpush1.msra.mxu0 0.0
        %267 = vmatprep.subr.mxu0 0.0
        %268 = vmatpush1.msra.mxu0 0.0
        %269 = vmatprep.subr.mxu0 0.0
        %270 = vmatpush1.msra.mxu0 0.0
        %271 = vmatprep.subr.mxu0 0.0
        %272 = vmatpush1.msra.mxu0 0.0
        %273 = vmatprep.subr.mxu0 0.0
        %274 = vmatpush1.msra.mxu0 0.0
        %275 = vmatprep.subr.mxu0 0.0
        %276 = vmatpush1.msra.mxu0 0.0
        %277 = vmatprep.subr.mxu0 0.0
        %278 = vmatpush1.msra.mxu0 0.0
        %279 = vmatprep.subr.mxu0 0.0
        %280 = vmatpush1.msra.mxu0 0.0
        %281 = vmatprep.mubr.f32.mxu0 0.0
        %282 = vmatmul.mubr.f32.gmra.mrb[0].mxu0 %v215
        %v283 = vpop.f32.mrb[0].mxu0
        %v284 = vadd.f32 %v211, %v283
        %v285 = vpop.f32.mrb[0].mxu0
        %286 = vdwg.mxu0
        %vm287 = vcmask 261120
        %288 = vst.msk [vmem:[%s185] sm:$0xff] %vm287, %v284
        %s289 = sand.u32 %s96, 1
        %s290 = scalar_lea.sflag [#allocation4], %s289
        %s291 = sand.u32 %s96, 1
        %s292 = smul.addr %s291, 8
        %s293 = scalar_lea.vmem [#allocation5], %s292
        // Predicated region
        $region37: #{tpu_custom_call.1} parent=31 // pred_check
          %p294 = pneg %p106
        $region38: #{tpu_custom_call.1} parent=31 // pred_check_branch
          %296 = sbr.rel (%p294) target = $region40
        $region39: #{tpu_custom_call.1} parent=31 // pred_region
          %s298 = ssub.s32 128, 128
          %299 = vsyncadd %s290, %s298
          %s300 = smul.addr %s20, 128
          %s301 = scalar_lea.hbm %s3, %s300
          %s303 = sshll.u32 %s293, 4
          %s304 = int_to_ptr.vmem [resolvable:$true] %s303
          %306 = dma.vmem_to_hbm [thread:$0]  %s304, 128, %s301, %s290
        $region40: #{tpu_custom_call.1} parent=31 // pred_fallthru
          _
      $region32: #{tpu_custom_call.1} parent=5 // pred_fallthru
        _
      %p307 = scmp.le.s32.totalorder 2, %s15
      // Predicated region
      $region41: #{tpu_custom_call.1} parent=5 // pred_check
        %p308 = pneg %p307
      $region42: #{tpu_custom_call.1} parent=5 // pred_check_branch
        %310 = sbr.rel (%p308) target = $region44
      $region43: #{tpu_custom_call.1} parent=5 // pred_region
        %s311 = ssub.s32 %s15, 2
        // Predicated region
        $region45: #{tpu_custom_call.1} parent=43 // pred_check
          %p312 = pneg %p112
        $region46: #{tpu_custom_call.1} parent=43 // pred_check_branch
          %314 = sbr.rel (%p312) target = $region48
        $region47: #{tpu_custom_call.1} parent=43 // pred_region
          %s315 = sand.u32 %s97, 1
          %s316 = scalar_lea.sflag [#allocation4], %s315
          %s317 = sand.u32 %s97, 1
          %s318 = smul.addr %s317, 8
          %s319 = scalar_lea.vmem [#allocation5], %s318
          %320 = dma.done %s316, 128
        $region48: #{tpu_custom_call.1} parent=43 // pred_fallthru
          _
      $region44: #{tpu_custom_call.1} parent=5 // pred_fallthru
        _
    $region6: #{tpu_custom_call.1} parent=1 // loop_footer
      %s19 = sadd.s32 1, %s15
    $region7: #{tpu_custom_call.1} parent=1 // loop_footer_branch
      %14 = sbr.rel target = $region3
    $region8: #{tpu_custom_call.1} parent=1 // loop_exit
      _
    %321 = vsyncpa [#allocation3], 1
    %s322 = scalar_lea.sflag [#allocation3], 1
    %323 = vsyncpa %s322, 1
    %324 = vsyncpa [#allocation4], 1
    %s325 = scalar_lea.sflag [#allocation4], 1
    %326 = vsyncpa %s325, 1

</llo_original>
